<compile_context>
chip_gen: v7x
topology: tpu7x:2x2x1
jax: 0.10.0
libtpu: 0.0.40
codegen_flags: <defaults>
</compile_context>

<pallas_src>
import math
import functools

import jax
import jax.numpy as jnp
from jax.experimental import pallas as pl
from jax.experimental.pallas import tpu as pltpu


def _sinusoidal_kernel(time_ref, out_ref, *, half_dim: int, neg_scale: float):
    # time_ref : (TB, 1)            f32 in VMEM
    # out_ref  : (TB, 2*half_dim)   out_dtype in VMEM
    # Frequency table generated in-kernel: iota -> mul -> exp (exp on EUP,
    # which is otherwise idle here).
    k = jax.lax.broadcasted_iota(jnp.int32, (1, half_dim), 1).astype(jnp.float32)
    freqs = jnp.exp(k * neg_scale)                       # (1, half_dim) f32
    args = time_ref[...] * freqs                         # (TB, half_dim) f32
    s = jnp.sin(args)
    c = jnp.cos(args)
    if half_dim % 128 == 0:
        # Both halves start on a lane-tile boundary -> two unmasked stores.
        out_ref[:, :half_dim] = s.astype(out_ref.dtype)
        out_ref[:, half_dim:] = c.astype(out_ref.dtype)
    else:
        # Narrow dim (e.g. dim=32): build the full row in registers and do a
        # single lane-dense store instead of a rotated + masked cos store.
        out_ref[...] = jnp.concatenate([s, c], axis=-1).astype(out_ref.dtype)


def sinusoidal_position_embeddings(time: jax.Array, dim: int, *,
                                   out_dtype=jnp.float32,
                                   small_path_bytes: int = 1 << 20,
                                   block_bytes: int = 2 << 20) -> jax.Array:
    """time: (B,) -> (B, dim) sinusoidal embeddings (sin half then cos half)."""
    assert dim % 2 == 0, "dim must be even"
    half_dim = dim // 2
    # half_dim == 1 would divide by zero exactly like the PyTorch module does;
    # keep the same failure mode but make it explicit.
    assert half_dim > 1, "dim must be >= 4 (half_dim - 1 must be nonzero)"
    neg_scale = -(math.log(10000.0) / (half_dim - 1))

    b = time.shape[0]
    time2d = time.astype(jnp.float32).reshape(b, 1)

    kernel = functools.partial(_sinusoidal_kernel,
                               half_dim=half_dim, neg_scale=neg_scale)
    out_itemsize = jnp.dtype(out_dtype).itemsize
    out_shape = jax.ShapeDtypeStruct((b, dim), out_dtype)
    total_bytes = b * dim * out_itemsize

    if total_bytes <= small_path_bytes:
        # Small output: single VMEM-resident block, no grid -> no software
        # pipeline prologue/epilogue, no double-buffer allocation.
        return pl.pallas_call(
            kernel,
            out_shape=out_shape,
            in_specs=[pl.BlockSpec(memory_space=pltpu.MemorySpace.VMEM)],
            out_specs=pl.BlockSpec(memory_space=pltpu.MemorySpace.VMEM),
        )(time2d)

    # Tiled path: target ~block_bytes of output per grid step, but always keep
    # at least 2 blocks so both v7x TensorCores get work ("parallel" axis).
    num_blocks = max(2, pl.cdiv(total_bytes, block_bytes))
    tile_b = max(8, ((pl.cdiv(b, num_blocks) + 7) // 8) * 8)   # multiple of 8
    # VMEM cap: 2x (tile_b, dim) out buffers + 2x lane-padded (tile_b, 128)
    # time buffers must stay well under v7x's 32 MiB default scoped VMEM.
    per_row_bytes = 2 * dim * out_itemsize + 2 * 128 * 4
    max_tile_b = max(8, ((16 * 1024 * 1024) // per_row_bytes) // 8 * 8)
    tile_b = min(tile_b, max_tile_b)

    grid = (pl.cdiv(b, tile_b),)
    return pl.pallas_call(
        kernel,
        out_shape=out_shape,
        grid=grid,
        in_specs=[pl.BlockSpec((tile_b, 1), lambda i: (i, 0))],
        out_specs=pl.BlockSpec((tile_b, dim), lambda i: (i, 0)),
        compiler_params=pltpu.CompilerParams(
            dimension_semantics=("parallel",)),
    )(time2d)


def _reference(time, dim):
    half_dim = dim // 2
    emb = math.log(10000.0) / (half_dim - 1)
    emb = jnp.exp(jnp.arange(half_dim, dtype=jnp.float32) * -emb)
    emb = time.astype(jnp.float32)[:, None] * emb[None, :]
    return jnp.concatenate([jnp.sin(emb), jnp.cos(emb)], axis=-1)


if __name__ == "__main__":
    key = jax.random.PRNGKey(0)

    # --- Small shape matching the module's typical use (diffusion timesteps). ---
    B, DIM = 8, 32
    time_small = jax.random.uniform(key, (B,), dtype=jnp.float32,
                                    minval=0.0, maxval=1000.0)
    out_small = jax.block_until_ready(
        sinusoidal_position_embeddings(time_small, DIM))
    ref_small = _reference(time_small, DIM)
    assert out_small.shape == (B, DIM), out_small.shape
    assert jnp.allclose(out_small, ref_small, atol=1e-5, rtol=1e-5), \
        "small-batch mismatch vs reference"

    # --- bf16 writeback path (looser tolerance: rounding only). ---
    out_bf16 = jax.block_until_ready(
        sinusoidal_position_embeddings(time_small, DIM, out_dtype=jnp.bfloat16))
    assert out_bf16.dtype == jnp.bfloat16
    assert jnp.allclose(out_bf16.astype(jnp.float32), ref_small,
                        atol=2e-2, rtol=2e-2), "bf16 path mismatch vs reference"

    # --- Larger batch exercises the tiled, parallel-grid, two-store path. ---
    B2, DIM2 = 2048, 256
    key2 = jax.random.PRNGKey(0)
    time_big = jax.random.uniform(key2, (B2,), dtype=jnp.float32,
                                  minval=0.0, maxval=1000.0)
    out_big = jax.block_until_ready(
        sinusoidal_position_embeddings(time_big, DIM2))
    ref_big = _reference(time_big, DIM2)
    assert out_big.shape == (B2, DIM2), out_big.shape
    assert jnp.allclose(out_big, ref_big, atol=1e-5, rtol=1e-5), \
        "tiled-path mismatch vs reference"

    print("KERNEL_OK")
</pallas_src>

<mosaic_0001>
module attributes {stable_mosaic.version = 11 : i64} {
  func.func @_sinusoidal_kernel(%arg0: memref<8x1xf32, #tpu.memory_space<vmem>>, %arg1: memref<8x32xf32, #tpu.memory_space<vmem>>) attributes {dimension_semantics = [], scalar_prefetch = 0 : i64, scratch_operands = 0 : i64, tpu.core_type = #tpu.core_type<tc>} {
    %0 = tpu.iota {dimensions = array<i32: 1>} : vector<1x16xi32>
    %1 = arith.sitofp %0 : vector<1x16xi32> to vector<1x16xf32>
    %cst = arith.constant -0.614022672 : f32
    %2 = vector.broadcast %cst : f32 to vector<1x16xf32>
    %3 = arith.mulf %1, %2 : vector<1x16xf32>
    %4 = math.exp %3 : vector<1x16xf32>
    %c0 = arith.constant 0 : index
    %c0_0 = arith.constant 0 : index
    %5 = vector.load %arg0[%c0, %c0_0] : memref<8x1xf32, #tpu.memory_space<vmem>>, vector<8x1xf32>
    %6 = vector.broadcast %5 : vector<8x1xf32> to vector<8x16xf32>
    %7 = vector.broadcast %4 : vector<1x16xf32> to vector<8x16xf32>
    %8 = arith.mulf %6, %7 : vector<8x16xf32>
    %9 = math.sin %8 : vector<8x16xf32>
    %10 = math.cos %8 : vector<8x16xf32>
    %11 = tpu.concatenate %9, %10 in 1 : vector<8x16xf32>, vector<8x16xf32> -> vector<8x32xf32>
    %c0_1 = arith.constant 0 : index
    %c0_2 = arith.constant 0 : index
    %12 = vector.load %arg1[%c0_1, %c0_2] : memref<8x32xf32, #tpu.memory_space<vmem>>, vector<8x32xf32>
    tpu.vector_store %arg1[%c0_1, %c0_2], %11 {strides = array<i32>} : memref<8x32xf32, #tpu.memory_space<vmem>>, vector<8x32xf32>,
    return
  }
}

</mosaic_0001>

<llo_original>
// kernel: tpu_custom_call.1
$region0: #{tpu_custom_call.1}
  #allocation0 [shape = 'u32[]', space=smem, size = 0x4, offset = 0x4, fixed_abs, tag = 'smem constant byte address 0x4 - core index']
  #allocation1 [shape = 'u32[144,128]{1,0:T(1,128)}', space=vmem, size = 0x12000, scoped, tag = 'internal scratch']
  %s0 = inlined_call_operand.vmem [shape: f32[8,1], index: 0, kind: input, shape index: {}]
  %s1 = inlined_call_operand.hbm [shape: f32[8,32], index: 1, kind: output, shape index: {}]
  %s2 = sld [smem:[#allocation0]]
  $region14: #{tpu_custom_call.1} parent=0
    _
  %s4 = ssub.s32 1, %s2
  %s5 = scalar_select 0, %s4, %s2
  $region1: #{tpu_custom_call.1} parent=0
    #allocation2 [shape = 'u8[4096]{0}', space=vmem, size = 0x1000, scoped, tag = 'output window, operand 0, single buffered']
    #allocation3 [shape = 's32[1]{0}', space=sflag, size = 0x4, scoped, tag = 'scoped memory for tpu_custom_call.1']
    %6 = vsyncpa [#allocation3], 0
    // Predicated region
    $region2: #{tpu_custom_call.1} parent=1 // pred_check
      _
    $region3: #{tpu_custom_call.1} parent=1 // pred_check_branch
      %8 = sbr.rel (0) target = $region5
    $region4: #{tpu_custom_call.1} parent=1 // pred_region
      _
    $region5: #{tpu_custom_call.1} parent=1 // pred_fallthru
      _
    %v9 = vlaneseq
    %v10 = vand.u32 %v9, 127
    %v11 = vcvt.s32.f32 %v10
    %v12 = vmul.f32 %v11, -0.6140227
    %v13 = vmul.f32 %v12, 1.442695
    %v14 = vpow.pop %v13
    %v15 = vld [vmem:[%s0] sm:$0xff]
    %17 = vset.pattern.permute.xlu0 0
    %18 = vperm.xlu0 %17, %v15
    %v19 = vpop.permute.xlu0 %18
    %v21 = vmul.f32 %v19, %v14
    %v22 = vand.u32 2147483647, %v21
    %vm23 = vcmp.le.f32.partialorder %v22, 0.7853982
    %vm24 = vcmp.lt.s32.totalorder %v21, 0
    %v25 = vand.u32 %v21, 2139095040
    %v26 = vshrl.u32 %v25, 23
    %v27 = vsub.s32 %v26, 127
    %v28 = vand.u32 2147483647, %v21
    %v29 = vand.u32 %v28, 8388607
    %v30 = vor.u32 %v29, 8388608
    %v31 = vsub.s32 0, %v30
    %v32 = vadd.s32 %v27, 1
    %vm33 = vcmp.gt.s32.totalorder %v32, 0
    %v34 = vsel %vm33, %v32, 0
    %v35 = vshrl.u32 %v34, 5
    %v36 = vand.u32 %v34, 31
    %v37 = vsub.s32 32, %v36
    %v38 = vshrl.u32 683565275, %v37
    %v39 = vshll.u32 683565275, %v36
    %v40 = vshrl.u32 2475754826, %v37
    %v41 = vor.u32 %v39, %v40
    %v42 = vshll.u32 2475754826, %v36
    %v43 = vshrl.u32 2131351028, %v37
    %v44 = vor.u32 %v42, %v43
    %v45 = vshll.u32 2131351028, %v36
    %v46 = vshrl.u32 2102212464, %v37
    %v47 = vor.u32 %v45, %v46
    %v48 = vshll.u32 2102212464, %v36
    %v49 = vshrl.u32 920167782, %v37
    %v50 = vor.u32 %v48, %v49
    %v51 = vshll.u32 920167782, %v36
    %v52 = vshrl.u32 1326507024, %v37
    %v53 = vor.u32 %v51, %v52
    %vm54 = vcmp.lt.s32.totalorder %v35, 1
    %vm55 = vcmp.lt.s32.totalorder %v35, 2
    %vm56 = vcmp.lt.s32.totalorder %v35, 3
    %vm57 = vcmp.lt.s32.totalorder %v35, 4
    %v58 = vsel %vm54, %v38, %v41
    %v59 = vsel %vm57, %v47, 2102212464
    %v60 = vsel %vm56, %v44, %v59
    %v61 = vsel %vm55, %v58, %v60
    %v62 = vsel %vm54, %v41, %v44
    %v63 = vsel %vm57, %v50, 920167782
    %v64 = vsel %vm56, %v47, %v63
    %v65 = vsel %vm55, %v62, %v64
    %v66 = vsel %vm54, %v44, %v47
    %v67 = vsel %vm57, %v53, 1326507024
    %v68 = vsel %vm56, %v50, %v67
    %v69 = vsel %vm55, %v66, %v68
    %v70 = vshll.u32 %v30, 8
    %v71 = vmul.u32.u64.compose %v70, %v69
    %v72 = vextract.low.u32 %v71
    %v73 = vextract.high.u32 %v71
    %v74 = vmul.u32.u64.compose %v70, %v65
    %v75 = vextract.low.u32 %v74
    %v76 = vextract.high.u32 %v74
    %v77 = vmul.u32 %v70, %v61
    %v78 = vadd.s32 %v73, %v75
    %vm79 = vc.u32 %v73, %v75
    %v80 = vadd.s32 %v76, 1
    %v81 = vsel %vm79, %v80, %v76
    %v82 = vadd.s32 %v77, %v81
    %v83 = vadd.s32 %v82, 536870912
    %v84 = vshrl.u32 %v83, 30
    %v85 = vshll.u32 %v84, 30
    %v86 = vsub.s32 %v82, %v85
    %vm87 = vcmp.lt.s32.totalorder %v86, 0
    %v88 = vsub.s32 0, %v86
    %v89 = vsel %vm87, %v88, %v86
    %v90 = vclz %v89
    %v91 = vsub.s32 %v90, 2
    %vm92 = vcmp.gt.s32.totalorder 0, %v91
    %v93 = vsel %vm92, 0, %v91
    %v94 = vsub.s32 32, %v93
    %v95 = vshll.u32 %v86, %v93
    %v96 = vshrl.u32 %v78, %v94
    %v97 = vor.u32 %v95, %v96
    %v98 = vsub.s32 4294967266, %v93
    %v99 = vadd.s32 %v98, 127
    %v100 = vshll.u32 %v99, 23
    %v101 = vor.u32 4788187, %v100
    %v102 = vand.u32 2147483647, %v101
    %v104 = vcvt.s32.f32 %v97
    %v105 = vmul.f32 %v104, %v102
    %v106 = vxor.u32 %v105, 2147483648
    %v107 = vsel %vm24, %v106, %v105
    %v108 = vsub.s32 4, %v84
    %v109 = vsel %vm24, %v108, %v84
    %v110 = vsel %vm23, %v21, %v107
    %v111 = vsel %vm23, 0, %v109
    %v112 = vcosq.f32.pop %v110
    %v113 = vsinq.f32.pop %v110
    %vm114 = vweird.f32 %v21
    %v115 = vadd.s32 %v111, 3
    %v116 = vand.u32 %v115, 3
    %vm117 = vcmp.lt.s32.totalorder %v116, 2
    %vm118 = vcmp.eq.s32.totalorder %v116, 0
    %v119 = vxor.u32 %v113, 2147483648
    %v120 = vsel %vm118, %v112, %v119
    %vm121 = vcmp.eq.s32.totalorder %v116, 2
    %v122 = vxor.u32 %v112, 2147483648
    %v123 = vsel %vm121, %v122, %v113
    %v124 = vsel %vm117, %v120, %v123
    %v125 = vsel %vm114, nan, %v124
    %v126 = vand.u32 2147483647, %v21
    %vm127 = vcmp.le.f32.partialorder %v126, 0.7853982
    %vm128 = vcmp.lt.s32.totalorder %v21, 0
    %v129 = vand.u32 %v21, 2139095040
    %v130 = vshrl.u32 %v129, 23
    %v131 = vsub.s32 %v130, 127
    %v132 = vand.u32 2147483647, %v21
    %v133 = vand.u32 %v132, 8388607
    %v134 = vor.u32 %v133, 8388608
    %v135 = vsub.s32 0, %v134
    %v136 = vadd.s32 %v131, 1
    %vm137 = vcmp.gt.s32.totalorder %v136, 0
    %v138 = vsel %vm137, %v136, 0
    %v139 = vshrl.u32 %v138, 5
    %v140 = vand.u32 %v138, 31
    %v141 = vsub.s32 32, %v140
    %v142 = vshrl.u32 683565275, %v141
    %v143 = vshll.u32 683565275, %v140
    %v144 = vshrl.u32 2475754826, %v141
    %v145 = vor.u32 %v143, %v144
    %v146 = vshll.u32 2475754826, %v140
    %v147 = vshrl.u32 2131351028, %v141
    %v148 = vor.u32 %v146, %v147
    %v149 = vshll.u32 2131351028, %v140
    %v150 = vshrl.u32 2102212464, %v141
    %v151 = vor.u32 %v149, %v150
    %v152 = vshll.u32 2102212464, %v140
    %v153 = vshrl.u32 920167782, %v141
    %v154 = vor.u32 %v152, %v153
    %v155 = vshll.u32 920167782, %v140
    %v156 = vshrl.u32 1326507024, %v141
    %v157 = vor.u32 %v155, %v156
    %vm158 = vcmp.lt.s32.totalorder %v139, 1
    %vm159 = vcmp.lt.s32.totalorder %v139, 2
    %vm160 = vcmp.lt.s32.totalorder %v139, 3
    %vm161 = vcmp.lt.s32.totalorder %v139, 4
    %v162 = vsel %vm158, %v142, %v145
    %v163 = vsel %vm161, %v151, 2102212464
    %v164 = vsel %vm160, %v148, %v163
    %v165 = vsel %vm159, %v162, %v164
    %v166 = vsel %vm158, %v145, %v148
    %v167 = vsel %vm161, %v154, 920167782
    %v168 = vsel %vm160, %v151, %v167
    %v169 = vsel %vm159, %v166, %v168
    %v170 = vsel %vm158, %v148, %v151
    %v171 = vsel %vm161, %v157, 1326507024
    %v172 = vsel %vm160, %v154, %v171
    %v173 = vsel %vm159, %v170, %v172
    %v174 = vshll.u32 %v134, 8
    %v175 = vmul.u32.u64.compose %v174, %v173
    %v176 = vextract.low.u32 %v175
    %v177 = vextract.high.u32 %v175
    %v178 = vmul.u32.u64.compose %v174, %v169
    %v179 = vextract.low.u32 %v178
    %v180 = vextract.high.u32 %v178
    %v181 = vmul.u32 %v174, %v165
    %v182 = vadd.s32 %v177, %v179
    %vm183 = vc.u32 %v177, %v179
    %v184 = vadd.s32 %v180, 1
    %v185 = vsel %vm183, %v184, %v180
    %v186 = vadd.s32 %v181, %v185
    %v187 = vadd.s32 %v186, 536870912
    %v188 = vshrl.u32 %v187, 30
    %v189 = vshll.u32 %v188, 30
    %v190 = vsub.s32 %v186, %v189
    %vm191 = vcmp.lt.s32.totalorder %v190, 0
    %v192 = vsub.s32 0, %v190
    %v193 = vsel %vm191, %v192, %v190
    %v194 = vclz %v193
    %v195 = vsub.s32 %v194, 2
    %vm196 = vcmp.gt.s32.totalorder 0, %v195
    %v197 = vsel %vm196, 0, %v195
    %v198 = vsub.s32 32, %v197
    %v199 = vshll.u32 %v190, %v197
    %v200 = vshrl.u32 %v182, %v198
    %v201 = vor.u32 %v199, %v200
    %v202 = vsub.s32 4294967266, %v197
    %v203 = vadd.s32 %v202, 127
    %v204 = vshll.u32 %v203, 23
    %v205 = vor.u32 4788187, %v204
    %v206 = vand.u32 2147483647, %v205
    %v208 = vcvt.s32.f32 %v201
    %v209 = vmul.f32 %v208, %v206
    %v210 = vxor.u32 %v209, 2147483648
    %v211 = vsel %vm128, %v210, %v209
    %v212 = vsub.s32 4, %v188
    %v213 = vsel %vm128, %v212, %v188
    %v214 = vsel %vm127, %v21, %v211
    %v215 = vsel %vm127, 0, %v213
    %v216 = vcosq.f32.pop %v214
    %v217 = vsinq.f32.pop %v214
    %vm218 = vweird.f32 %v21
    %v219 = vand.u32 %v215, 3
    %vm220 = vcmp.lt.s32.totalorder %v219, 2
    %vm221 = vcmp.eq.s32.totalorder %v219, 0
    %v222 = vxor.u32 %v217, 2147483648
    %v223 = vsel %vm221, %v216, %v222
    %vm224 = vcmp.eq.s32.totalorder %v219, 2
    %v225 = vxor.u32 %v216, 2147483648
    %v226 = vsel %vm224, %v225, %v217
    %v227 = vsel %vm220, %v223, %v226
    %v228 = vsel %vm218, nan, %v227
    %230 = vrot.lane.b32.xlu0 %v228, 16
    %v231 = vpop.permute.xlu0 %230
    %vm233 = vcmask 130048
    %v234 = vsel %vm233, %v125, %v231
    %vm235 = vcmask 261120
    %236 = vst.msk [vmem:[#allocation2] sm:$0xff] %vm235, %v234
    // Predicated region
    $region6: #{tpu_custom_call.1} parent=1 // pred_check
      _
    $region7: #{tpu_custom_call.1} parent=1 // pred_check_branch
      %238 = sbr.rel (0) target = $region9
    $region8: #{tpu_custom_call.1} parent=1 // pred_region
      %s240 = ssub.s32 128, 128
      %241 = vsyncadd [#allocation3], %s240
      %s243 = sshll.u32 [#allocation2], 4
      %s244 = int_to_ptr.vmem [resolvable:$true] %s243
      %246 = dma.vmem_to_hbm [thread:$0]  %s244, 128, %s1, [#allocation3]
    $region9: #{tpu_custom_call.1} parent=1 // pred_fallthru
      _
    // Predicated region
    $region10: #{tpu_custom_call.1} parent=1 // pred_check
      _
    $region11: #{tpu_custom_call.1} parent=1 // pred_check_branch
      %248 = sbr.rel (0) target = $region13
    $region12: #{tpu_custom_call.1} parent=1 // pred_region
      %249 = dma.done [#allocation3], 128
    $region13: #{tpu_custom_call.1} parent=1 // pred_fallthru
      _
    %250 = vsyncpa [#allocation3], 1

</llo_original>
